<compile_context>
chip_gen: v7x
topology: tpu7x:2x2x1
jax: 0.10.0
libtpu: 0.0.40
codegen_flags: <defaults>
</compile_context>

<pallas_src>
import functools

import jax
import jax.numpy as jnp
from jax.experimental import pallas as pl
from jax.experimental.pallas import tpu as pltpu


def q_critic_kernel(s_ref, a_ref, w1_ref, w2a_ref, w2b_ref, w3a_ref, w3b_ref,
                    bias_ref, q_ref, sa_ref):
    """Fused twin-critic MLP on one [tile_b, *] batch block.

    sa = [state | action]                               (built in VMEM scratch)
    h  = relu(sa @ W1_fused + b1)                        -> [tile_b, 2W]
    h1 = relu(h[:, :W] @ W2 + b2_1); h2 = relu(h[:, W:] @ W5 + b2_2)
    q1 = h1 @ W3 + b3_1;             q2 = h2 @ W6 + b3_2
    """
    state_dim = s_ref.shape[1]
    W = w2a_ref.shape[0]            # net_width

    bias = bias_ref[...]            # [3, 2W] f32
    b1 = bias[0:1, :]               # layer-1 bias (both heads)
    b2 = bias[1:2, :]               # layer-2 bias (both heads)
    b3 = bias[2:3, :]               # layer-3 bias in lanes 0..1

    # Assemble the torch-level concat([state, action]) in a VMEM scratch:
    # two cheap column stores (VPU/vst work that hides under MXU slack).
    sa_ref[:, :state_dim] = s_ref[...]
    sa_ref[:, state_dim:] = a_ref[...]
    sa = sa_ref[...].astype(jnp.bfloat16)

    # Layer 1: one K=in_dim bf16 dot for both heads (W1 | W4 fused side by side).
    h = jnp.dot(sa, w1_ref[...], preferred_element_type=jnp.float32) + b1
    h = jnp.maximum(h, 0.0).astype(jnp.bfloat16)          # [tile_b, 2W] bf16

    # Layer 2: per-head dots with the original [W, W] weights (no block-diagonal zeros).
    h1 = jnp.dot(h[:, :W], w2a_ref[...], preferred_element_type=jnp.float32) + b2[:, :W]
    h2 = jnp.dot(h[:, W:], w2b_ref[...], preferred_element_type=jnp.float32) + b2[:, W:]
    h1 = jnp.maximum(h1, 0.0).astype(jnp.bfloat16)
    h2 = jnp.maximum(h2, 0.0).astype(jnp.bfloat16)

    # Layer 3: per-head [W, 1] dots; results land in lanes 0 / 1 of the [tile_b, 2] block.
    q1 = jnp.dot(h1, w3a_ref[...], preferred_element_type=jnp.float32) + b3[:, 0:1]
    q2 = jnp.dot(h2, w3b_ref[...], preferred_element_type=jnp.float32) + b3[:, 1:2]
    q_ref[:, 0:1] = q1.astype(q_ref.dtype)
    q_ref[:, 1:2] = q2.astype(q_ref.dtype)


def pack_params(params):
    """Pack the 12 per-layer tensors (weights stored as [in, out], biases as [1, out])
    into the 6 arrays the kernel consumes.  Weights go to bf16; biases stay f32."""
    (w1, b1, w2, b2, w3, b3, w4, b4, w5, b5, w6, b6) = params
    _, W = w1.shape

    # Layer 1: twin heads side by side -> one [in_dim, 2W] bf16 weight.
    w1f = jnp.concatenate([w1, w4], axis=1).astype(jnp.bfloat16)
    # Layers 2/3: original per-head weights (un-fused; no structural zeros).
    w2a = w2.astype(jnp.bfloat16)
    w2b = w5.astype(jnp.bfloat16)
    w3a = w3.astype(jnp.bfloat16)
    w3b = w6.astype(jnp.bfloat16)

    # Biases (f32): row 0 = layer-1, row 1 = layer-2, row 2 = [b3, b6, 0, ...].
    b1f = jnp.concatenate([b1, b4], axis=1)                      # [1, 2W]
    b2f = jnp.concatenate([b2, b5], axis=1)                      # [1, 2W]
    b3f = jnp.zeros((1, 2 * W), jnp.float32)
    b3f = b3f.at[:, 0:1].set(b3).at[:, 1:2].set(b6)
    biases = jnp.concatenate([b1f, b2f, b3f], axis=0)            # [3, 2W]

    return w1f, w2a, w2b, w3a, w3b, biases


def _round_up(x, m):
    return ((x + m - 1) // m) * m


@functools.partial(jax.jit, static_argnames=("tile_b",))
def q_critic_forward(state, action, packed, tile_b=1024):
    """Returns (q1, q2), each [B, 1] f32, matching the PyTorch module's forward."""
    w1f, w2a, w2b, w3a, w3b, biases = packed
    B, state_dim = state.shape
    action_dim = action.shape[1]
    in_dim = state_dim + action_dim
    W2 = w1f.shape[1]          # 2 * net_width
    W = W2 // 2

    # Block size: cap at tile_b (keeps per-block VMEM bounded on v7x), multiple of 8.
    tb = min(tile_b, _round_up(B, 8))
    tb = _round_up(tb, 8)
    # Pad ragged batches instead of collapsing to a single whole-batch block.
    padded_b = _round_up(B, tb)
    if padded_b != B:
        pad = padded_b - B
        state = jnp.pad(state, ((0, pad), (0, 0)))
        action = jnp.pad(action, ((0, pad), (0, 0)))
    grid = (padded_b // tb,)

    q = pl.pallas_call(
        q_critic_kernel,
        out_shape=jax.ShapeDtypeStruct((padded_b, 2), jnp.float32),
        grid=grid,
        in_specs=[
            pl.BlockSpec((tb, state_dim), lambda i: (i, 0)),    # state batch block
            pl.BlockSpec((tb, action_dim), lambda i: (i, 0)),   # action batch block
            pl.BlockSpec((in_dim, W2), lambda i: (0, 0)),       # W1 fused (resident)
            pl.BlockSpec((W, W), lambda i: (0, 0)),             # W2 head 1 (resident)
            pl.BlockSpec((W, W), lambda i: (0, 0)),             # W5 head 2 (resident)
            pl.BlockSpec((W, 1), lambda i: (0, 0)),             # W3 head 1 (resident)
            pl.BlockSpec((W, 1), lambda i: (0, 0)),             # W6 head 2 (resident)
            pl.BlockSpec((3, W2), lambda i: (0, 0)),            # packed biases (resident)
        ],
        out_specs=pl.BlockSpec((tb, 2), lambda i: (i, 0)),      # q1 | q2 in lanes 0..1
        scratch_shapes=[pltpu.VMEM((tb, in_dim), jnp.float32)], # sa = [state | action]
        compiler_params=pltpu.CompilerParams(
            dimension_semantics=("parallel",),
            vmem_limit_bytes=48 * 1024 * 1024,
        ),
    )(state, action, w1f, w2a, w2b, w3a, w3b, biases)

    q = q[:B]
    return q[:, 0:1], q[:, 1:2]


def init_params(key, state_dim, action_dim, net_width):
    """Deterministic synthetic parameter init (shapes mirror the nn.Linear layers)."""
    in_dim = state_dim + action_dim
    ks = jax.random.split(key, 12)

    def w(k, fin, fout):
        bound = 1.0 / jnp.sqrt(jnp.asarray(fin, jnp.float32))
        return jax.random.uniform(k, (fin, fout), jnp.float32, -bound, bound)

    def b(k, fin, fout):
        bound = 1.0 / jnp.sqrt(jnp.asarray(fin, jnp.float32))
        return jax.random.uniform(k, (1, fout), jnp.float32, -bound, bound)

    return (
        w(ks[0], in_dim, net_width),    b(ks[1], in_dim, net_width),     # l1
        w(ks[2], net_width, net_width), b(ks[3], net_width, net_width),  # l2
        w(ks[4], net_width, 1),         b(ks[5], net_width, 1),          # l3
        w(ks[6], in_dim, net_width),    b(ks[7], in_dim, net_width),     # l4
        w(ks[8], net_width, net_width), b(ks[9], net_width, net_width),  # l5
        w(ks[10], net_width, 1),        b(ks[11], net_width, 1),         # l6
    )


def reference_forward(state, action, params):
    """Pure-JAX f32 reference matching the PyTorch module."""
    (w1, b1, w2, b2, w3, b3, w4, b4, w5, b5, w6, b6) = params
    sa = jnp.concatenate([state, action], axis=1)
    h1 = jax.nn.relu(sa @ w1 + b1)
    h1 = jax.nn.relu(h1 @ w2 + b2)
    q1 = h1 @ w3 + b3
    h2 = jax.nn.relu(sa @ w4 + b4)
    h2 = jax.nn.relu(h2 @ w5 + b5)
    q2 = h2 @ w6 + b6
    return q1, q2


def _run_case(key, state_dim, action_dim, net_width, batch, tile_b):
    k_params, k_state, k_action = jax.random.split(key, 3)
    params = init_params(k_params, state_dim, action_dim, net_width)
    packed = pack_params(params)
    state = jax.random.normal(k_state, (batch, state_dim), jnp.float32)
    action = jax.random.normal(k_action, (batch, action_dim), jnp.float32)

    q1, q2 = q_critic_forward(state, action, packed, tile_b=tile_b)
    jax.block_until_ready((q1, q2))

    q1_ref, q2_ref = reference_forward(state, action, params)
    assert q1.shape == (batch, 1) and q2.shape == (batch, 1)
    # bf16 matmuls with f32 accumulation -> loosened tolerance vs. f32 reference.
    assert jnp.allclose(q1, q1_ref, atol=3e-2, rtol=3e-2), "q1 mismatch"
    assert jnp.allclose(q2, q2_ref, atol=3e-2, rtol=3e-2), "q2 mismatch"


if __name__ == "__main__":
    key = jax.random.PRNGKey(0)
    k0, k1 = jax.random.split(key)

    # Small canonical case (batch=2).
    _run_case(k0, state_dim=12, action_dim=4, net_width=32, batch=2, tile_b=1024)
    # Ragged batch + lane-aligned net_width: exercises padding + multi-block grid.
    _run_case(k1, state_dim=17, action_dim=6, net_width=128, batch=100, tile_b=64)

    print("KERNEL_OK")
</pallas_src>

<mosaic_0001>
module attributes {stable_mosaic.version = 11 : i64} {
  func.func @q_critic_kernel(%arg0: i32, %arg1: memref<8x12xf32, #tpu.memory_space<vmem>>, %arg2: memref<8x4xf32, #tpu.memory_space<vmem>>, %arg3: memref<16x64xbf16, #tpu.memory_space<vmem>>, %arg4: memref<32x32xbf16, #tpu.memory_space<vmem>>, %arg5: memref<32x32xbf16, #tpu.memory_space<vmem>>, %arg6: memref<32x1xbf16, #tpu.memory_space<vmem>>, %arg7: memref<32x1xbf16, #tpu.memory_space<vmem>>, %arg8: memref<3x64xf32, #tpu.memory_space<vmem>>, %arg9: memref<8x2xf32, #tpu.memory_space<vmem>>, %arg10: memref<8x16xf32, #tpu.memory_space<vmem>>) attributes {dimension_semantics = [#tpu.dimension_semantics<parallel>], iteration_bounds = array<i64: 1>, scalar_prefetch = 0 : i64, scratch_operands = 1 : i64, tpu.core_type = #tpu.core_type<tc>, window_params = [{transform_indices = @transform_0, window_bounds = array<i64: 8, 12>}, {transform_indices = @transform_1, window_bounds = array<i64: 8, 4>}, {pipeline_mode = #tpu.pipeline_mode<synchronous>, transform_indices = @transform_2, window_bounds = array<i64: 16, 64>}, {pipeline_mode = #tpu.pipeline_mode<synchronous>, transform_indices = @transform_3, window_bounds = array<i64: 32, 32>}, {pipeline_mode = #tpu.pipeline_mode<synchronous>, transform_indices = @transform_4, window_bounds = array<i64: 32, 32>}, {pipeline_mode = #tpu.pipeline_mode<synchronous>, transform_indices = @transform_5, window_bounds = array<i64: 32, 1>}, {pipeline_mode = #tpu.pipeline_mode<synchronous>, transform_indices = @transform_6, window_bounds = array<i64: 32, 1>}, {pipeline_mode = #tpu.pipeline_mode<synchronous>, transform_indices = @transform_7, window_bounds = array<i64: 3, 64>}, {transform_indices = @transform_8, window_bounds = array<i64: 8, 2>}]} {
    %c0 = arith.constant 0 : index
    %c0_0 = arith.constant 0 : index
    %0 = vector.load %arg8[%c0, %c0_0] : memref<3x64xf32, #tpu.memory_space<vmem>>, vector<3x64xf32>
    %1 = vector.extract_strided_slice %0 {offsets = [0, 0], sizes = [1, 64], strides = [1, 1]} : vector<3x64xf32> to vector<1x64xf32>
    %2 = vector.extract_strided_slice %0 {offsets = [1, 0], sizes = [1, 64], strides = [1, 1]} : vector<3x64xf32> to vector<1x64xf32>
    %3 = vector.extract_strided_slice %0 {offsets = [2, 0], sizes = [1, 64], strides = [1, 1]} : vector<3x64xf32> to vector<1x64xf32>
    %c0_1 = arith.constant 0 : index
    %c0_2 = arith.constant 0 : index
    %4 = vector.load %arg1[%c0_1, %c0_2] : memref<8x12xf32, #tpu.memory_space<vmem>>, vector<8x12xf32>
    %c0_3 = arith.constant 0 : index
    %c0_4 = arith.constant 0 : index
    %5 = vector.load %arg10[%c0_3, %c0_4] : memref<8x16xf32, #tpu.memory_space<vmem>>, vector<8x12xf32>
    tpu.vector_store %arg10[%c0_3, %c0_4], %4 {strides = array<i32>} : memref<8x16xf32, #tpu.memory_space<vmem>>, vector<8x12xf32>,
    %c0_5 = arith.constant 0 : index
    %c0_6 = arith.constant 0 : index
    %6 = vector.load %arg2[%c0_5, %c0_6] : memref<8x4xf32, #tpu.memory_space<vmem>>, vector<8x4xf32>
    %c0_7 = arith.constant 0 : index
    %c12 = arith.constant 12 : index
    %7 = vector.load %arg10[%c0_7, %c12] : memref<8x16xf32, #tpu.memory_space<vmem>>, vector<8x4xf32>
    tpu.vector_store %arg10[%c0_7, %c12], %6 {strides = array<i32>} : memref<8x16xf32, #tpu.memory_space<vmem>>, vector<8x4xf32>,
    %c0_8 = arith.constant 0 : index
    %c0_9 = arith.constant 0 : index
    %8 = vector.load %arg10[%c0_8, %c0_9] : memref<8x16xf32, #tpu.memory_space<vmem>>, vector<8x16xf32>
    %9 = arith.truncf %8 : vector<8x16xf32> to vector<8x16xbf16>
    %c0_10 = arith.constant 0 : index
    %c0_11 = arith.constant 0 : index
    %10 = vector.load %arg3[%c0_10, %c0_11] : memref<16x64xbf16, #tpu.memory_space<vmem>>, vector<16x64xbf16>
    %cst = arith.constant dense<0.000000e+00> : vector<8x64xf32>
    %11 = tpu.matmul %9, %10, %cst {dimension_numbers = #tpu.dot_dimension_numbers<[1], [0], [0], [1], [0, 0, 1, 1], [], []>} : vector<8x16xbf16>, vector<16x64xbf16>, vector<8x64xf32> -> vector<8x64xf32>
    %12 = vector.broadcast %1 : vector<1x64xf32> to vector<8x64xf32>
    %13 = arith.addf %11, %12 : vector<8x64xf32>
    %cst_12 = arith.constant 0.000000e+00 : f32
    %14 = vector.broadcast %cst_12 : f32 to vector<8x64xf32>
    %15 = arith.maximumf %13, %14 : vector<8x64xf32>
    %16 = arith.truncf %15 : vector<8x64xf32> to vector<8x64xbf16>
    %17 = vector.extract_strided_slice %16 {offsets = [0, 0], sizes = [8, 32], strides = [1, 1]} : vector<8x64xbf16> to vector<8x32xbf16>
    %c0_13 = arith.constant 0 : index
    %c0_14 = arith.constant 0 : index
    %18 = vector.load %arg4[%c0_13, %c0_14] : memref<32x32xbf16, #tpu.memory_space<vmem>>, vector<32x32xbf16>
    %cst_15 = arith.constant dense<0.000000e+00> : vector<8x32xf32>
    %19 = tpu.matmul %17, %18, %cst_15 {dimension_numbers = #tpu.dot_dimension_numbers<[1], [0], [0], [1], [0, 0, 1, 1], [], []>} : vector<8x32xbf16>, vector<32x32xbf16>, vector<8x32xf32> -> vector<8x32xf32>
    %20 = vector.extract_strided_slice %2 {offsets = [0, 0], sizes = [1, 32], strides = [1, 1]} : vector<1x64xf32> to vector<1x32xf32>
    %21 = vector.broadcast %20 : vector<1x32xf32> to vector<8x32xf32>
    %22 = arith.addf %19, %21 : vector<8x32xf32>
    %23 = vector.extract_strided_slice %16 {offsets = [0, 32], sizes = [8, 32], strides = [1, 1]} : vector<8x64xbf16> to vector<8x32xbf16>
    %c0_16 = arith.constant 0 : index
    %c0_17 = arith.constant 0 : index
    %24 = vector.load %arg5[%c0_16, %c0_17] : memref<32x32xbf16, #tpu.memory_space<vmem>>, vector<32x32xbf16>
    %cst_18 = arith.constant dense<0.000000e+00> : vector<8x32xf32>
    %25 = tpu.matmul %23, %24, %cst_18 {dimension_numbers = #tpu.dot_dimension_numbers<[1], [0], [0], [1], [0, 0, 1, 1], [], []>} : vector<8x32xbf16>, vector<32x32xbf16>, vector<8x32xf32> -> vector<8x32xf32>
    %26 = vector.extract_strided_slice %2 {offsets = [0, 32], sizes = [1, 32], strides = [1, 1]} : vector<1x64xf32> to vector<1x32xf32>
    %27 = vector.broadcast %26 : vector<1x32xf32> to vector<8x32xf32>
    %28 = arith.addf %25, %27 : vector<8x32xf32>
    %cst_19 = arith.constant 0.000000e+00 : f32
    %29 = vector.broadcast %cst_19 : f32 to vector<8x32xf32>
    %30 = arith.maximumf %22, %29 : vector<8x32xf32>
    %31 = arith.truncf %30 : vector<8x32xf32> to vector<8x32xbf16>
    %cst_20 = arith.constant 0.000000e+00 : f32
    %32 = vector.broadcast %cst_20 : f32 to vector<8x32xf32>
    %33 = arith.maximumf %28, %32 : vector<8x32xf32>
    %34 = arith.truncf %33 : vector<8x32xf32> to vector<8x32xbf16>
    %c0_21 = arith.constant 0 : index
    %c0_22 = arith.constant 0 : index
    %35 = vector.load %arg6[%c0_21, %c0_22] : memref<32x1xbf16, #tpu.memory_space<vmem>>, vector<32x1xbf16>
    %cst_23 = arith.constant dense<0.000000e+00> : vector<8x1xf32>
    %36 = tpu.matmul %31, %35, %cst_23 {dimension_numbers = #tpu.dot_dimension_numbers<[1], [0], [0], [1], [0, 0, 1, 1], [], []>} : vector<8x32xbf16>, vector<32x1xbf16>, vector<8x1xf32> -> vector<8x1xf32>
    %37 = vector.extract_strided_slice %3 {offsets = [0, 0], sizes = [1, 1], strides = [1, 1]} : vector<1x64xf32> to vector<1x1xf32>
    %38 = vector.broadcast %37 : vector<1x1xf32> to vector<8x1xf32>
    %39 = arith.addf %36, %38 : vector<8x1xf32>
    %c0_24 = arith.constant 0 : index
    %c0_25 = arith.constant 0 : index
    %40 = vector.load %arg7[%c0_24, %c0_25] : memref<32x1xbf16, #tpu.memory_space<vmem>>, vector<32x1xbf16>
    %cst_26 = arith.constant dense<0.000000e+00> : vector<8x1xf32>
    %41 = tpu.matmul %34, %40, %cst_26 {dimension_numbers = #tpu.dot_dimension_numbers<[1], [0], [0], [1], [0, 0, 1, 1], [], []>} : vector<8x32xbf16>, vector<32x1xbf16>, vector<8x1xf32> -> vector<8x1xf32>
    %42 = vector.extract_strided_slice %3 {offsets = [0, 1], sizes = [1, 1], strides = [1, 1]} : vector<1x64xf32> to vector<1x1xf32>
    %43 = vector.broadcast %42 : vector<1x1xf32> to vector<8x1xf32>
    %44 = arith.addf %41, %43 : vector<8x1xf32>
    %c0_27 = arith.constant 0 : index
    %c0_28 = arith.constant 0 : index
    %45 = vector.load %arg9[%c0_27, %c0_28] : memref<8x2xf32, #tpu.memory_space<vmem>>, vector<8x1xf32>
    tpu.vector_store %arg9[%c0_27, %c0_28], %39 {strides = array<i32>} : memref<8x2xf32, #tpu.memory_space<vmem>>, vector<8x1xf32>,
    %c0_29 = arith.constant 0 : index
    %c1 = arith.constant 1 : index
    %46 = vector.load %arg9[%c0_29, %c1] : memref<8x2xf32, #tpu.memory_space<vmem>>, vector<8x1xf32>
    tpu.vector_store %arg9[%c0_29, %c1], %44 {strides = array<i32>} : memref<8x2xf32, #tpu.memory_space<vmem>>, vector<8x1xf32>,
    return
  }
  func.func @transform_0(%arg0: i32) -> (i32, i32) {
    %c0_i32 = arith.constant 0 : i32
    %c0_i32_0 = arith.constant 0 : i32
    return %arg0, %c0_i32 : i32, i32
  }
  func.func @transform_1(%arg0: i32) -> (i32, i32) {
    %c0_i32 = arith.constant 0 : i32
    %c0_i32_0 = arith.constant 0 : i32
    return %arg0, %c0_i32 : i32, i32
  }
  func.func @transform_2(%arg0: i32) -> (i32, i32) {
    %c0_i32 = arith.constant 0 : i32
    %c0_i32_0 = arith.constant 0 : i32
    %c0_i32_1 = arith.constant 0 : i32
    return %c0_i32, %c0_i32_0 : i32, i32
  }
  func.func @transform_3(%arg0: i32) -> (i32, i32) {
    %c0_i32 = arith.constant 0 : i32
    %c0_i32_0 = arith.constant 0 : i32
    %c0_i32_1 = arith.constant 0 : i32
    return %c0_i32, %c0_i32_0 : i32, i32
  }
  func.func @transform_4(%arg0: i32) -> (i32, i32) {
    %c0_i32 = arith.constant 0 : i32
    %c0_i32_0 = arith.constant 0 : i32
    %c0_i32_1 = arith.constant 0 : i32
    return %c0_i32, %c0_i32_0 : i32, i32
  }
  func.func @transform_5(%arg0: i32) -> (i32, i32) {
    %c0_i32 = arith.constant 0 : i32
    %c0_i32_0 = arith.constant 0 : i32
    %c0_i32_1 = arith.constant 0 : i32
    return %c0_i32, %c0_i32_0 : i32, i32
  }
  func.func @transform_6(%arg0: i32) -> (i32, i32) {
    %c0_i32 = arith.constant 0 : i32
    %c0_i32_0 = arith.constant 0 : i32
    %c0_i32_1 = arith.constant 0 : i32
    return %c0_i32, %c0_i32_0 : i32, i32
  }
  func.func @transform_7(%arg0: i32) -> (i32, i32) {
    %c0_i32 = arith.constant 0 : i32
    %c0_i32_0 = arith.constant 0 : i32
    %c0_i32_1 = arith.constant 0 : i32
    return %c0_i32, %c0_i32_0 : i32, i32
  }
  func.func @transform_8(%arg0: i32) -> (i32, i32) {
    %c0_i32 = arith.constant 0 : i32
    %c0_i32_0 = arith.constant 0 : i32
    return %arg0, %c0_i32 : i32, i32
  }
}

</mosaic_0001>

<llo_original>
// kernel: q_critic_forward.1
$region0: #{q_critic_forward.1}
  #allocation0 [shape = 'u32[]', space=smem, size = 0x4, offset = 0x4, fixed_abs, tag = 'smem constant byte address 0x4 - core index']
  #allocation1 [shape = 'u32[144,128]{1,0:T(1,128)}', space=vmem, size = 0x12000, scoped, tag = 'internal scratch']
  #allocation2 [shape = 'f32[8,16]{1,0:T(8,128)}', space=vmem, size = 0x1000, scoped, tag = 'scratch operand']
  %s0 = inlined_call_operand.vmem [shape: f32[8,12], index: 0, kind: input, shape index: {}]
  %s1 = inlined_call_operand.vmem [shape: f32[8,4], index: 1, kind: input, shape index: {}]
  %s2 = inlined_call_operand.vmem [shape: bf16[16,64], index: 2, kind: input, shape index: {}]
  %s3 = inlined_call_operand.vmem [shape: bf16[32,32], index: 3, kind: input, shape index: {}]
  %s4 = inlined_call_operand.vmem [shape: bf16[32,32], index: 4, kind: input, shape index: {}]
  %s5 = inlined_call_operand.vmem [shape: bf16[32,1], index: 5, kind: input, shape index: {}]
  %s6 = inlined_call_operand.vmem [shape: bf16[32,1], index: 6, kind: input, shape index: {}]
  %s7 = inlined_call_operand.vmem [shape: f32[3,64], index: 7, kind: input, shape index: {}]
  %s8 = inlined_call_operand.vmem [shape: f32[8,2], index: 8, kind: output, shape index: {}]
  %s9 = sld [smem:[#allocation0]]
  $region42: #{q_critic_forward.1} parent=0
    _
  %s11 = ssub.s32 1, %s9
  %s12 = scalar_select 0, %s11, %s9
  // Predicated region
  $region2: #{q_critic_forward.1} parent=0 // pred_check
    _
  $region3: #{q_critic_forward.1} parent=0 // pred_check_branch
    %14 = sbr.rel (0) target = $region5
  $region4: #{q_critic_forward.1} parent=0 // pred_region
    _
  $region5: #{q_critic_forward.1} parent=0 // pred_fallthru
    _
  // Predicated region
  $region6: #{q_critic_forward.1} parent=0 // pred_check
    _
  $region7: #{q_critic_forward.1} parent=0 // pred_check_branch
    %16 = sbr.rel (0) target = $region9
  $region8: #{q_critic_forward.1} parent=0 // pred_region
    _
  $region9: #{q_critic_forward.1} parent=0 // pred_fallthru
    _
  // Predicated region
  $region10: #{q_critic_forward.1} parent=0 // pred_check
    _
  $region11: #{q_critic_forward.1} parent=0 // pred_check_branch
    %18 = sbr.rel (0) target = $region13
  $region12: #{q_critic_forward.1} parent=0 // pred_region
    _
  $region13: #{q_critic_forward.1} parent=0 // pred_fallthru
    _
  // Predicated region
  $region14: #{q_critic_forward.1} parent=0 // pred_check
    _
  $region15: #{q_critic_forward.1} parent=0 // pred_check_branch
    %20 = sbr.rel (0) target = $region17
  $region16: #{q_critic_forward.1} parent=0 // pred_region
    _
  $region17: #{q_critic_forward.1} parent=0 // pred_fallthru
    _
  // Predicated region
  $region18: #{q_critic_forward.1} parent=0 // pred_check
    _
  $region19: #{q_critic_forward.1} parent=0 // pred_check_branch
    %22 = sbr.rel (0) target = $region21
  $region20: #{q_critic_forward.1} parent=0 // pred_region
    _
  $region21: #{q_critic_forward.1} parent=0 // pred_fallthru
    _
  // Predicated region
  $region22: #{q_critic_forward.1} parent=0 // pred_check
    _
  $region23: #{q_critic_forward.1} parent=0 // pred_check_branch
    %24 = sbr.rel (0) target = $region25
  $region24: #{q_critic_forward.1} parent=0 // pred_region
    _
  $region25: #{q_critic_forward.1} parent=0 // pred_fallthru
    _
  // Predicated region
  $region26: #{q_critic_forward.1} parent=0 // pred_check
    _
  $region27: #{q_critic_forward.1} parent=0 // pred_check_branch
    %26 = sbr.rel (0) target = $region29
  $region28: #{q_critic_forward.1} parent=0 // pred_region
    _
  $region29: #{q_critic_forward.1} parent=0 // pred_fallthru
    _
  // Predicated region
  $region30: #{q_critic_forward.1} parent=0 // pred_check
    _
  $region31: #{q_critic_forward.1} parent=0 // pred_check_branch
    %28 = sbr.rel (0) target = $region33
  $region32: #{q_critic_forward.1} parent=0 // pred_region
    _
  $region33: #{q_critic_forward.1} parent=0 // pred_fallthru
    _
  %v30 = vld [vmem:[%s7] sm:$0x7]
  %v31 = vld [vmem:[%s0] sm:$0xff]
  %vm32 = vcmask 97280
  %33 = vst.msk [vmem:[#allocation2] sm:$0xff] %vm32, %v31
  %v34 = vld [vmem:[%s1] sm:$0xff]
  %36 = vrot.lane.b32.xlu0 %v34, 12
  %v37 = vpop.permute.xlu0 %36
  %vm39 = vcmask 130144
  %40 = vst.msk [vmem:[#allocation2] sm:$0xff] %vm39, %v37
  %v41 = vld [vmem:[#allocation2] sm:$0xff]
  %v42 = vpack.c.bf16 %v41, %v41
  %v43 = vld [vmem:[%s2] sm:$0xf]
  %v44 = vld [vmem:[%s2 + $0x4] sm:$0xf]
  %v45 = vlaneseq
  %v46 = vshrl.u32 %v45, 7
  %v47 = vsub.s32 0, %v46
  %v48 = vrot.slane %v30, %v47
  %v51 = vunpack.c.l.b16 %v43
  %v52 = vunpack.c.l.b16 %v44
  %v53 = vpack.c.b16 %v52, %v51
  %vm55 = vcmask 130048
  %v57 = vsel %vm55, %v42, 0
  %59 = vmatprep.subr.bf16.mxu0 0
  %60 = vmatpush1.bf16.msra.mxu0 %v53
  %61 = vmatprep.subr.bf16.mxu0 0
  %62 = vmatpush1.bf16.msra.mxu0 0
  %63 = vmatprep.subr.bf16.mxu0 0
  %64 = vmatpush1.bf16.msra.mxu0 0
  %65 = vmatprep.subr.bf16.mxu0 0
  %66 = vmatpush1.bf16.msra.mxu0 0
  %67 = vmatprep.subr.bf16.mxu0 0
  %68 = vmatpush1.bf16.msra.mxu0 0
  %69 = vmatprep.subr.bf16.mxu0 0
  %70 = vmatpush1.bf16.msra.mxu0 0
  %71 = vmatprep.subr.bf16.mxu0 0
  %72 = vmatpush1.bf16.msra.mxu0 0
  %73 = vmatprep.subr.bf16.mxu0 0
  %74 = vmatpush1.bf16.msra.mxu0 0
  %75 = vmatprep.subr.bf16.mxu0 0
  %76 = vmatpush1.bf16.msra.mxu0 0
  %77 = vmatprep.subr.bf16.mxu0 0
  %78 = vmatpush1.bf16.msra.mxu0 0
  %79 = vmatprep.subr.bf16.mxu0 0
  %80 = vmatpush1.bf16.msra.mxu0 0
  %81 = vmatprep.subr.bf16.mxu0 0
  %82 = vmatpush1.bf16.msra.mxu0 0
  %83 = vmatprep.subr.bf16.mxu0 0
  %84 = vmatpush1.bf16.msra.mxu0 0
  %85 = vmatprep.subr.bf16.mxu0 0
  %86 = vmatpush1.bf16.msra.mxu0 0
  %87 = vmatprep.subr.bf16.mxu0 0
  %88 = vmatpush1.bf16.msra.mxu0 0
  %89 = vmatprep.subr.bf16.mxu0 0
  %90 = vmatpush1.bf16.msra.mxu0 0
  %91 = vmatprep.mubr.bf16.mxu0 0
  %92 = vmatmul.mubr.bf16.gmra.mrb[0].mxu0 %v57
  %v93 = vpop.f32.mrb[0].mxu0
  %v94 = vadd.f32 %v48, %v93
  %v95 = vpop.f32.mrb[0].mxu0
  %v96 = vpop.f32.mrb[0].mxu0
  %v97 = vpop.f32.mrb[0].mxu0
  %98 = vdwg.mxu0
  %v99 = vmax.f32 %v94, 0.0
  %v100 = vpack.c.bf16 %v99, %v99
  %v101 = vld [vmem:[%s3] sm:$0xf]
  %v102 = vld [vmem:[%s3 + $0x4] sm:$0xf]
  %v103 = vld [vmem:[%s3 + $0x8] sm:$0xf]
  %v104 = vld [vmem:[%s3 + $0xc] sm:$0xf]
  %v105 = vlaneseq
  %v106 = vshrl.u32 %v105, 7
  %v107 = vsub.s32 1, %v106
  %v108 = vrot.slane %v30, %v107
  %v113 = vunpack.c.l.b16 %v101
  %v114 = vunpack.c.l.b16 %v102
  %v115 = vunpack.c.l.b16 %v103
  %v116 = vunpack.c.l.b16 %v104
  %v117 = vpack.c.b16 %v114, %v113
  %v118 = vpack.c.b16 %v116, %v115
  %vm121 = vcmask 261120
  %v123 = vsel %vm121, %v100, 0
  %125 = vmatprep.subr.bf16.mxu0 0
  %126 = vmatpush1.bf16.msra.mxu0 %v117
  %127 = vmatprep.subr.bf16.mxu0 0
  %128 = vmatpush1.bf16.msra.mxu0 %v118
  %129 = vmatprep.subr.bf16.mxu0 0
  %130 = vmatpush1.bf16.msra.mxu0 0
  %131 = vmatprep.subr.bf16.mxu0 0
  %132 = vmatpush1.bf16.msra.mxu0 0
  %133 = vmatprep.subr.bf16.mxu0 0
  %134 = vmatpush1.bf16.msra.mxu0 0
  %135 = vmatprep.subr.bf16.mxu0 0
  %136 = vmatpush1.bf16.msra.mxu0 0
  %137 = vmatprep.subr.bf16.mxu0 0
  %138 = vmatpush1.bf16.msra.mxu0 0
  %139 = vmatprep.subr.bf16.mxu0 0
  %140 = vmatpush1.bf16.msra.mxu0 0
  %141 = vmatprep.subr.bf16.mxu0 0
  %142 = vmatpush1.bf16.msra.mxu0 0
  %143 = vmatprep.subr.bf16.mxu0 0
  %144 = vmatpush1.bf16.msra.mxu0 0
  %145 = vmatprep.subr.bf16.mxu0 0
  %146 = vmatpush1.bf16.msra.mxu0 0
  %147 = vmatprep.subr.bf16.mxu0 0
  %148 = vmatpush1.bf16.msra.mxu0 0
  %149 = vmatprep.subr.bf16.mxu0 0
  %150 = vmatpush1.bf16.msra.mxu0 0
  %151 = vmatprep.subr.bf16.mxu0 0
  %152 = vmatpush1.bf16.msra.mxu0 0
  %153 = vmatprep.subr.bf16.mxu0 0
  %154 = vmatpush1.bf16.msra.mxu0 0
  %155 = vmatprep.subr.bf16.mxu0 0
  %156 = vmatpush1.bf16.msra.mxu0 0
  %157 = vmatprep.mubr.bf16.mxu0 0
  %158 = vmatmul.mubr.bf16.gmra.mrb[0].mxu0 %v123
  %v159 = vpop.f32.mrb[0].mxu0
  %v160 = vadd.f32 %v108, %v159
  %v161 = vpop.f32.mrb[0].mxu0
  %v162 = vpop.f32.mrb[0].mxu0
  %v163 = vpop.f32.mrb[0].mxu0
  %164 = vdwg.mxu0
  %v165 = vld [vmem:[%s4] sm:$0xf]
  %v166 = vld [vmem:[%s4 + $0x4] sm:$0xf]
  %v167 = vld [vmem:[%s4 + $0x8] sm:$0xf]
  %v168 = vld [vmem:[%s4 + $0xc] sm:$0xf]
  %170 = vrot.lane.b32.xlu0 %v100, 96
  %v171 = vpop.permute.xlu0 %170
  %v176 = vunpack.c.l.b16 %v165
  %v177 = vunpack.c.l.b16 %v166
  %v178 = vunpack.c.l.b16 %v167
  %v179 = vunpack.c.l.b16 %v168
  %v180 = vpack.c.b16 %v177, %v176
  %v181 = vpack.c.b16 %v179, %v178
  %185 = vrot.lane.b32.xlu0 %v108, 96
  %v186 = vpop.permute.xlu0 %185
  %v189 = vsel %vm121, %v171, 0
  %191 = vmatprep.subr.bf16.mxu0 0
  %192 = vmatpush1.bf16.msra.mxu0 %v180
  %193 = vmatprep.subr.bf16.mxu0 0
  %194 = vmatpush1.bf16.msra.mxu0 %v181
  %195 = vmatprep.subr.bf16.mxu0 0
  %196 = vmatpush1.bf16.msra.mxu0 0
  %197 = vmatprep.subr.bf16.mxu0 0
  %198 = vmatpush1.bf16.msra.mxu0 0
  %199 = vmatprep.subr.bf16.mxu0 0
  %200 = vmatpush1.bf16.msra.mxu0 0
  %201 = vmatprep.subr.bf16.mxu0 0
  %202 = vmatpush1.bf16.msra.mxu0 0
  %203 = vmatprep.subr.bf16.mxu0 0
  %204 = vmatpush1.bf16.msra.mxu0 0
  %205 = vmatprep.subr.bf16.mxu0 0
  %206 = vmatpush1.bf16.msra.mxu0 0
  %207 = vmatprep.subr.bf16.mxu0 0
  %208 = vmatpush1.bf16.msra.mxu0 0
  %209 = vmatprep.subr.bf16.mxu0 0
  %210 = vmatpush1.bf16.msra.mxu0 0
  %211 = vmatprep.subr.bf16.mxu0 0
  %212 = vmatpush1.bf16.msra.mxu0 0
  %213 = vmatprep.subr.bf16.mxu0 0
  %214 = vmatpush1.bf16.msra.mxu0 0
  %215 = vmatprep.subr.bf16.mxu0 0
  %216 = vmatpush1.bf16.msra.mxu0 0
  %217 = vmatprep.subr.bf16.mxu0 0
  %218 = vmatpush1.bf16.msra.mxu0 0
  %219 = vmatprep.subr.bf16.mxu0 0
  %220 = vmatpush1.bf16.msra.mxu0 0
  %221 = vmatprep.subr.bf16.mxu0 0
  %222 = vmatpush1.bf16.msra.mxu0 0
  %223 = vmatprep.mubr.bf16.mxu0 0
  %224 = vmatmul.mubr.bf16.gmra.mrb[0].mxu0 %v189
  %v225 = vpop.f32.mrb[0].mxu0
  %v226 = vadd.f32 %v186, %v225
  %v227 = vpop.f32.mrb[0].mxu0
  %v228 = vpop.f32.mrb[0].mxu0
  %v229 = vpop.f32.mrb[0].mxu0
  %230 = vdwg.mxu0
  %v231 = vmax.f32 %v160, 0.0
  %v232 = vpack.c.bf16 %v231, %v231
  %v233 = vmax.f32 %v226, 0.0
  %v234 = vpack.c.bf16 %v233, %v233
  %v235 = vld [vmem:[%s5] sm:$0xf]
  %v236 = vld [vmem:[%s5 + $0x4] sm:$0xf]
  %v237 = vld [vmem:[%s5 + $0x8] sm:$0xf]
  %v238 = vld [vmem:[%s5 + $0xc] sm:$0xf]
  %v239 = vlaneseq
  %v240 = vshrl.u32 %v239, 7
  %v241 = vsub.s32 2, %v240
  %v242 = vrot.slane %v30, %v241
  %v247 = vunpack.c.l.b16 %v235
  %v248 = vunpack.c.l.b16 %v236
  %v249 = vunpack.c.l.b16 %v237
  %v250 = vunpack.c.l.b16 %v238
  %v251 = vpack.c.b16 %v248, %v247
  %v252 = vpack.c.b16 %v250, %v249
  %v256 = vsel %vm121, %v232, 0
  %258 = vmatprep.subr.bf16.mxu0 0
  %259 = vmatpush1.bf16.msra.mxu0 %v251
  %260 = vmatprep.subr.bf16.mxu0 0
  %261 = vmatpush1.bf16.msra.mxu0 %v252
  %262 = vmatprep.subr.bf16.mxu0 0
  %263 = vmatpush1.bf16.msra.mxu0 0
  %264 = vmatprep.subr.bf16.mxu0 0
  %265 = vmatpush1.bf16.msra.mxu0 0
  %266 = vmatprep.subr.bf16.mxu0 0
  %267 = vmatpush1.bf16.msra.mxu0 0
  %268 = vmatprep.subr.bf16.mxu0 0
  %269 = vmatpush1.bf16.msra.mxu0 0
  %270 = vmatprep.subr.bf16.mxu0 0
  %271 = vmatpush1.bf16.msra.mxu0 0
  %272 = vmatprep.subr.bf16.mxu0 0
  %273 = vmatpush1.bf16.msra.mxu0 0
  %274 = vmatprep.subr.bf16.mxu0 0
  %275 = vmatpush1.bf16.msra.mxu0 0
  %276 = vmatprep.subr.bf16.mxu0 0
  %277 = vmatpush1.bf16.msra.mxu0 0
  %278 = vmatprep.subr.bf16.mxu0 0
  %279 = vmatpush1.bf16.msra.mxu0 0
  %280 = vmatprep.subr.bf16.mxu0 0
  %281 = vmatpush1.bf16.msra.mxu0 0
  %282 = vmatprep.subr.bf16.mxu0 0
  %283 = vmatpush1.bf16.msra.mxu0 0
  %284 = vmatprep.subr.bf16.mxu0 0
  %285 = vmatpush1.bf16.msra.mxu0 0
  %286 = vmatprep.subr.bf16.mxu0 0
  %287 = vmatpush1.bf16.msra.mxu0 0
  %288 = vmatprep.subr.bf16.mxu0 0
  %289 = vmatpush1.bf16.msra.mxu0 0
  %290 = vmatprep.mubr.bf16.mxu0 0
  %291 = vmatmul.mubr.bf16.gmra.mrb[0].mxu0 %v256
  %v292 = vpop.f32.mrb[0].mxu0
  %v293 = vadd.f32 %v242, %v292
  %v294 = vpop.f32.mrb[0].mxu0
  %v295 = vpop.f32.mrb[0].mxu0
  %v296 = vpop.f32.mrb[0].mxu0
  %297 = vdwg.mxu0
  %v298 = vld [vmem:[%s6] sm:$0xf]
  %v299 = vld [vmem:[%s6 + $0x4] sm:$0xf]
  %v300 = vld [vmem:[%s6 + $0x8] sm:$0xf]
  %v301 = vld [vmem:[%s6 + $0xc] sm:$0xf]
  %v306 = vunpack.c.l.b16 %v298
  %v307 = vunpack.c.l.b16 %v299
  %v308 = vunpack.c.l.b16 %v300
  %v309 = vunpack.c.l.b16 %v301
  %v310 = vpack.c.b16 %v307, %v306
  %v311 = vpack.c.b16 %v309, %v308
  %315 = vrot.lane.b32.xlu0 %v242, 127
  %v316 = vpop.permute.xlu0 %315
  %v319 = vsel %vm121, %v234, 0
  %321 = vmatprep.subr.bf16.mxu0 0
  %322 = vmatpush1.bf16.msra.mxu0 %v310
  %323 = vmatprep.subr.bf16.mxu0 0
  %324 = vmatpush1.bf16.msra.mxu0 %v311
  %325 = vmatprep.subr.bf16.mxu0 0
  %326 = vmatpush1.bf16.msra.mxu0 0
  %327 = vmatprep.subr.bf16.mxu0 0
  %328 = vmatpush1.bf16.msra.mxu0 0
  %329 = vmatprep.subr.bf16.mxu0 0
  %330 = vmatpush1.bf16.msra.mxu0 0
  %331 = vmatprep.subr.bf16.mxu0 0
  %332 = vmatpush1.bf16.msra.mxu0 0
  %333 = vmatprep.subr.bf16.mxu0 0
  %334 = vmatpush1.bf16.msra.mxu0 0
  %335 = vmatprep.subr.bf16.mxu0 0
  %336 = vmatpush1.bf16.msra.mxu0 0
  %337 = vmatprep.subr.bf16.mxu0 0
  %338 = vmatpush1.bf16.msra.mxu0 0
  %339 = vmatprep.subr.bf16.mxu0 0
  %340 = vmatpush1.bf16.msra.mxu0 0
  %341 = vmatprep.subr.bf16.mxu0 0
  %342 = vmatpush1.bf16.msra.mxu0 0
  %343 = vmatprep.subr.bf16.mxu0 0
  %344 = vmatpush1.bf16.msra.mxu0 0
  %345 = vmatprep.subr.bf16.mxu0 0
  %346 = vmatpush1.bf16.msra.mxu0 0
  %347 = vmatprep.subr.bf16.mxu0 0
  %348 = vmatpush1.bf16.msra.mxu0 0
  %349 = vmatprep.subr.bf16.mxu0 0
  %350 = vmatpush1.bf16.msra.mxu0 0
  %351 = vmatprep.subr.bf16.mxu0 0
  %352 = vmatpush1.bf16.msra.mxu0 0
  %353 = vmatprep.mubr.bf16.mxu0 0
  %354 = vmatmul.mubr.bf16.gmra.mrb[0].mxu0 %v319
  %v355 = vpop.f32.mrb[0].mxu0
  %v356 = vadd.f32 %v316, %v355
  %v357 = vpop.f32.mrb[0].mxu0
  %v358 = vpop.f32.mrb[0].mxu0
  %v359 = vpop.f32.mrb[0].mxu0
  %360 = vdwg.mxu0
  %vm361 = vcmask 7168
  %362 = vst.msk [vmem:[%s8] sm:$0xff] %vm361, %v293
  %364 = vrot.lane.b32.xlu0 %v356, 1
  %v365 = vpop.permute.xlu0 %364
  %vm367 = vcmask 15368
  %368 = vst.msk [vmem:[%s8] sm:$0xff] %vm367, %v365
  // Predicated region
  $region34: #{q_critic_forward.1} parent=0 // pred_check
    _
  $region35: #{q_critic_forward.1} parent=0 // pred_check_branch
    %370 = sbr.rel (0) target = $region37
  $region36: #{q_critic_forward.1} parent=0 // pred_region
    _
  $region37: #{q_critic_forward.1} parent=0 // pred_fallthru
    _
  // Predicated region
  $region38: #{q_critic_forward.1} parent=0 // pred_check
    _
  $region39: #{q_critic_forward.1} parent=0 // pred_check_branch
    %372 = sbr.rel (0) target = $region41
  $region40: #{q_critic_forward.1} parent=0 // pred_region
    _
  $region41: #{q_critic_forward.1} parent=0 // pred_fallthru
    _

</llo_original>
